<compile_context>
chip_gen: v7x
topology: tpu7x:2x2x1
jax: 0.10.0
libtpu: 0.0.40
codegen_flags: <defaults>
</compile_context>

<pallas_src>
import functools

import jax
import jax.numpy as jnp
from jax import lax
from jax.experimental import pallas as pl
from jax.experimental.pallas import tpu as pltpu

_INV_SQRT2 = 0.7071067811865476
_BN_EPS = 1e-5
# v5e option: route GELU through the EUP tanh approximation (erf is a VALU polynomial there).
# Default off to match torch.nn.GELU() exactly.
_USE_TANH_GELU = False


def _gelu(x):
    if _USE_TANH_GELU:
        c = 0.7978845608028654  # sqrt(2/pi)
        return 0.5 * x * (1.0 + jnp.tanh(c * (x + 0.044715 * x * x * x)))
    return 0.5 * x * (1.0 + lax.erf(x * _INV_SQRT2))


def _round_up(x, m):
    return ((x + m - 1) // m) * m


@functools.lru_cache(maxsize=None)
def _vmem_limit_bytes():
    # Generation-aware scoped-VMEM budget: 3/4 of physical (v5e/v6e: 128 MiB, v7x: 64 MiB).
    try:
        cap = int(pltpu.get_tpu_info().vmem_capacity_bytes)
    except Exception:
        cap = 64 * 1024 * 1024
    return max(32 * 1024 * 1024, min((cap * 3) // 4, 100 * 1024 * 1024))


def _pick_row_tile(m, target):
    """Largest multiple-of-8 row tile <= target dividing m; prefer >=2 grid steps."""
    cands = [t for t in range(8, min(target, m) + 1, 8) if m % t == 0]
    if not cands:
        return m
    tm = max(cands)
    if m // tm < 2:
        two_step = [t for t in cands if m // t >= 2]
        if two_step:
            tm = max(two_step)
    return tm


# -------- kernel 1: patch embedding  (x @ W + b) -> GELU -> folded BatchNorm ---------------
def _mm_gelu_bn_kernel(x_ref, w_ref, v_ref, o_ref):
    # v_ref rows: 0 = bias, 1 = bn scale, 2 = bn shift (padded to 8 rows)
    b = v_ref[0:1, :]
    scale = v_ref[1:2, :]
    shift = v_ref[2:3, :]
    y = jnp.dot(x_ref[...], w_ref[...], preferred_element_type=jnp.float32)
    y = _gelu(y + b)
    o_ref[...] = (y * scale + shift).astype(o_ref.dtype)


def matmul_gelu_bn(x, w, b, scale, shift, *, out_dtype=jnp.bfloat16, tm_target=1024):
    M, K = x.shape
    Kw, Dout = w.shape
    assert K == Kw
    tm = _pick_row_tile(M, tm_target)
    vecs = jnp.concatenate(
        [jnp.stack([b, scale, shift]).astype(jnp.float32),
         jnp.zeros((5, Dout), jnp.float32)], axis=0)
    flops = 2 * M * K * Dout
    bytes_acc = (M * K + K * Dout + M * Dout) * 2 + 8 * Dout * 4
    return pl.pallas_call(
        _mm_gelu_bn_kernel,
        out_shape=jax.ShapeDtypeStruct((M, Dout), out_dtype),
        grid_spec=pltpu.PrefetchScalarGridSpec(
            num_scalar_prefetch=0,
            grid=(M // tm,),
            in_specs=[
                pl.BlockSpec((tm, K), lambda i: (i, 0)),
                pl.BlockSpec((K, Dout), lambda i: (0, 0)),
                pl.BlockSpec((8, Dout), lambda i: (0, 0)),
            ],
            out_specs=pl.BlockSpec((tm, Dout), lambda i: (i, 0)),
        ),
        compiler_params=pltpu.CompilerParams(
            dimension_semantics=("parallel",), vmem_limit_bytes=_vmem_limit_bytes()),
        cost_estimate=pl.CostEstimate(flops=flops, transcendentals=M * Dout,
                                      bytes_accessed=bytes_acc),
    )(x, w, vecs)


# -------- kernel 2: one fused ConvMixer layer ----------------------------------------------
# depthwise KxK conv -> GELU -> BN1 -> +residual  (staged to bf16 VMEM)
#   -> one (H*W, D) @ (D, D) pointwise MXU matmul -> GELU -> BN2
def _layer_kernel(x_ref, wdw_ref, vecs_ref, wpw_ref, o_ref, xpad_ref, ystage_ref,
                  *, ksize, row_chunk, lpad):
    _, H, W, D = x_ref.shape
    pad = ksize // 2
    hp2, wp2, _ = xpad_ref.shape
    rc = row_chunk

    # --- halo-only zeroing (re-done every grid step: safe under megacore sharding) ---------
    xpad_ref[0:pad, :, :] = jnp.zeros((pad, wp2, D), jnp.bfloat16)
    xpad_ref[pad + H:hp2, :, :] = jnp.zeros((hp2 - pad - H, wp2, D), jnp.bfloat16)
    xpad_ref[pad:pad + H, 0:lpad, :] = jnp.zeros((H, lpad, D), jnp.bfloat16)
    xpad_ref[pad:pad + H, lpad + W:wp2, :] = jnp.zeros((H, wp2 - lpad - W, D), jnp.bfloat16)
    # interior copied straight in bf16 (phase-aligned column offset lpad)
    xpad_ref[pad:pad + H, lpad:lpad + W, :] = x_ref[0]

    # --- per-channel vectors & depthwise taps: loaded once, hoisted out of the row loop ----
    b_dw = vecs_ref[0:1, :]
    s1 = vecs_ref[1:2, :]
    t1 = vecs_ref[2:3, :]
    b_pw = vecs_ref[3:4, :]
    s2 = vecs_ref[4:5, :]
    t2 = vecs_ref[5:6, :]
    taps = [wdw_ref[i:i + 1, :] for i in range(ksize * ksize)]

    # --- depthwise conv: one aligned slab load per kh, kw shifts via pltpu.roll (XLU) ------
    # TODO(synk): on v6e/v7x the slab could stay bf16 through the roll/MAC for ~2x VALU
    # throughput; kept f32 math here for cross-generation lowering safety and fidelity.
    for r0 in range(0, H, rc):
        acc = jnp.zeros((rc, W, D), jnp.float32)
        for kh in range(ksize):
            slab = xpad_ref[r0 + kh:r0 + kh + rc, :, :]
            slab = slab.reshape(rc * wp2, D).astype(jnp.float32)
            for kw in range(ksize):
                off = lpad - pad + kw
                shifted = slab if off == 0 else pltpu.roll(slab, rc * wp2 - off, 0)
                win = shifted.reshape(rc, wp2, D)[:, :W, :]
                acc = acc + win * taps[kh * ksize + kw]
        y = _gelu(acc + b_dw) * s1 + t1
        # residual from the already-resident input block (no second DMA of x)
        y = y + x_ref[0, r0:r0 + rc, :, :].astype(jnp.float32)
        ystage_ref[r0 * W:(r0 + rc) * W, :] = y.reshape(rc * W, D).astype(jnp.bfloat16)

    # --- 1x1 pointwise conv as one large, well-shaped MXU matmul ----------------------------
    z = jnp.dot(ystage_ref[...], wpw_ref[...], preferred_element_type=jnp.float32)
    z = _gelu(z + b_pw) * s2 + t2
    o_ref[...] = z.reshape(o_ref.shape).astype(o_ref.dtype)


def convmixer_layer(x_nhwc, w_dw, b_dw, s1, t1, w_pw, b_pw, s2, t2, ksize):
    N, H, W, D = x_nhwc.shape
    pad = ksize // 2
    lpad = _round_up(pad, 2)               # even interior column offset (bf16 phase aligned)
    wp2 = _round_up(lpad + W + pad, 16)    # padded width, bf16-tile aligned
    rc = 8 if (H % 8 == 0) else H
    # TODO(synk): for large H*W*D (v7x 64 MiB VMEM) add a spatial row-block grid axis with
    # halo DMA instead of one whole image per grid step, and shrink rc for vreg pressure.
    kernel = functools.partial(_layer_kernel, ksize=ksize, row_chunk=rc, lpad=lpad)
    vecs = jnp.concatenate(
        [jnp.stack([b_dw, s1, t1, b_pw, s2, t2]).astype(jnp.float32),
         jnp.zeros((2, D), jnp.float32)], axis=0)
    flops = 2 * N * H * W * D * D + 2 * N * H * W * D * ksize * ksize
    bytes_acc = 2 * (N * H * W * D * 2) + D * D * 2 + (ksize * ksize + 8) * D * 4
    return pl.pallas_call(
        kernel,
        out_shape=jax.ShapeDtypeStruct((N, H, W, D), jnp.bfloat16),
        grid_spec=pltpu.PrefetchScalarGridSpec(
            num_scalar_prefetch=0,
            grid=(N,),
            in_specs=[
                pl.BlockSpec((1, H, W, D), lambda n: (n, 0, 0, 0)),
                pl.BlockSpec((ksize * ksize, D), lambda n: (0, 0)),
                pl.BlockSpec((8, D), lambda n: (0, 0)),
                # TODO(synk): at large D mark this constant-index weight pl.Buffered(1) to
                # drop the redundant second pipeline buffer (saves D*D*2 bytes of VMEM).
                pl.BlockSpec((D, D), lambda n: (0, 0)),
            ],
            out_specs=pl.BlockSpec((1, H, W, D), lambda n: (n, 0, 0, 0)),
            scratch_shapes=[
                pltpu.VMEM((H + 2 * pad, wp2, D), jnp.bfloat16),  # padded tile (bf16)
                pltpu.VMEM((H * W, D), jnp.bfloat16),             # staged rows for the MXU
            ],
        ),
        compiler_params=pltpu.CompilerParams(
            dimension_semantics=("parallel",), vmem_limit_bytes=_vmem_limit_bytes()),
        cost_estimate=pl.CostEstimate(flops=flops, transcendentals=2 * N * H * W * D,
                                      bytes_accessed=bytes_acc),
    )(x_nhwc,
      w_dw.astype(jnp.float32),
      vecs,
      w_pw.astype(jnp.bfloat16))


# -------- kernel 3: AdaptiveAvgPool2d((1,1)) + Flatten + Linear head ------------------------
def _head_kernel(x_ref, w_ref, b_ref, o_ref, acc_ref, *, inv_p):
    @pl.when(pl.program_id(1) == 0)
    def _():
        acc_ref[...] = jnp.zeros_like(acc_ref)

    acc_ref[...] += jnp.sum(x_ref[0].astype(jnp.float32), axis=0, keepdims=True)

    @pl.when(pl.program_id(1) == pl.num_programs(1) - 1)
    def _():
        pooled = acc_ref[...] * inv_p
        y = jnp.dot(pooled, w_ref[...], preferred_element_type=jnp.float32) + b_ref[...]
        o_ref[...] = y.reshape(o_ref.shape).astype(o_ref.dtype)


def pool_linear(x_seq, w, b, *, tp_target=512):
    N, P, D = x_seq.shape
    Dw, Cn = w.shape
    assert D == Dw
    tp = _pick_row_tile(P, tp_target)
    kernel = functools.partial(_head_kernel, inv_p=1.0 / P)
    out = pl.pallas_call(
        kernel,
        out_shape=jax.ShapeDtypeStruct((N, 1, Cn), jnp.float32),
        grid_spec=pltpu.PrefetchScalarGridSpec(
            num_scalar_prefetch=0,
            grid=(N, P // tp),
            in_specs=[
                pl.BlockSpec((1, tp, D), lambda n, p: (n, p, 0)),
                pl.BlockSpec((D, Cn), lambda n, p: (0, 0)),
                pl.BlockSpec((1, Cn), lambda n, p: (0, 0)),
            ],
            out_specs=pl.BlockSpec((1, 1, Cn), lambda n, p: (n, 0, 0)),
            scratch_shapes=[pltpu.VMEM((1, D), jnp.float32)],
        ),
        compiler_params=pltpu.CompilerParams(
            dimension_semantics=("parallel", "arbitrary"),
            vmem_limit_bytes=_vmem_limit_bytes()),
    )(x_seq, w.astype(jnp.float32), b.reshape(1, -1).astype(jnp.float32))
    return out.reshape(N, Cn)


# --------------------------------- parameters & forward -------------------------------------
def _fold_bn(gamma, beta, mean, var):
    # TODO(synk): BatchNorm implemented in eval mode (running stats folded to scale/shift);
    # training-mode batch statistics would need an extra cross-(N,H,W) reduction pass.
    scale = gamma / jnp.sqrt(var + _BN_EPS)
    shift = beta - mean * scale
    return scale, shift


def init_params(key, *, channel_size, patch_size, d_channel, num_layer, class_num,
                kernel_size=7):
    ks = jax.random.split(key, 4 + num_layer)

    def nrm(k, shape, s=0.1):
        return s * jax.random.normal(k, shape, jnp.float32)

    def bn(k, d):
        k1, k2, k3, k4 = jax.random.split(k, 4)
        gamma = 1.0 + 0.1 * jax.random.normal(k1, (d,), jnp.float32)
        beta = 0.1 * jax.random.normal(k2, (d,), jnp.float32)
        mean = 0.1 * jax.random.normal(k3, (d,), jnp.float32)
        var = jax.random.uniform(k4, (d,), jnp.float32, minval=0.5, maxval=1.5)
        return _fold_bn(gamma, beta, mean, var)

    params = {}
    params["in_w"] = nrm(ks[0], (d_channel, channel_size, patch_size, patch_size))
    params["in_b"] = nrm(ks[1], (d_channel,))
    params["in_bn"] = bn(ks[2], d_channel)
    layers = []
    for l in range(num_layer):
        k = jax.random.split(ks[4 + l], 6)
        dw_w = nrm(k[0], (d_channel, 1, kernel_size, kernel_size))   # torch depthwise weight
        dw_b = nrm(k[1], (d_channel,))
        bn1 = bn(k[2], d_channel)
        pw_w = nrm(k[3], (d_channel, d_channel, 1, 1))               # torch pointwise weight
        pw_b = nrm(k[4], (d_channel,))
        bn2 = bn(k[5], d_channel)
        layers.append((dw_w, dw_b, bn1, pw_w, pw_b, bn2))
    params["layers"] = layers
    params["out_w"] = nrm(ks[3], (class_num, d_channel))             # torch Linear weight
    params["out_b"] = jnp.zeros((class_num,), jnp.float32)
    return params


def convmixer_forward(x_nchw, params, *, patch_size, kernel_size=7):
    N, C, H, W = x_nchw.shape
    p = patch_size
    Hp, Wp = H // p, W // p
    D = params["in_b"].shape[0]

    # patch embedding (stride==kernel conv) as a patch matmul; K padded to a lane multiple
    xp = x_nchw.reshape(N, C, Hp, p, Wp, p).transpose(0, 2, 4, 1, 3, 5)
    xp = xp.reshape(N * Hp * Wp, C * p * p)
    K = C * p * p
    Kp = _round_up(K, 128)
    xp = jnp.pad(xp, ((0, 0), (0, Kp - K))).astype(jnp.bfloat16)
    w_in = params["in_w"].reshape(D, K).T
    w_in = jnp.pad(w_in, ((0, Kp - K), (0, 0))).astype(jnp.bfloat16)
    s0, t0 = params["in_bn"]
    x = matmul_gelu_bn(xp, w_in, params["in_b"], s0, t0)             # bf16 (M, D)
    x = x.reshape(N, Hp, Wp, D)

    # fused ConvMixer layers
    for dw_w, dw_b, bn1, pw_w, pw_b, bn2 in params["layers"]:
        w_dw = dw_w[:, 0, :, :].transpose(1, 2, 0).reshape(kernel_size * kernel_size, D)
        w_pw = pw_w[:, :, 0, 0].T                                    # (Din, Dout)
        s1, t1 = bn1
        s2, t2 = bn2
        x = convmixer_layer(x, w_dw, dw_b, s1, t1, w_pw, pw_b, s2, t2, kernel_size)

    # AdaptiveAvgPool2d((1,1)) + Flatten + Linear (f32 logits)
    logits = pool_linear(x.reshape(N, Hp * Wp, D), params["out_w"].T, params["out_b"])
    return logits


if __name__ == "__main__":
    image_size, patch_size, channel_size = 16, 2, 3
    num_layer, d_channel, class_num = 2, 128, 10
    batch = 2

    key = jax.random.PRNGKey(0)
    kx, kp = jax.random.split(key)
    x = jax.random.normal(kx, (batch, channel_size, image_size, image_size), jnp.float32)
    params = init_params(kp, channel_size=channel_size, patch_size=patch_size,
                         d_channel=d_channel, num_layer=num_layer, class_num=class_num,
                         kernel_size=7)

    logits = convmixer_forward(x, params, patch_size=patch_size, kernel_size=7)
    jax.block_until_ready(logits)
    assert logits.shape == (batch, class_num)
    assert bool(jnp.all(jnp.isfinite(logits)))
    print("KERNEL_OK")
</pallas_src>

<mosaic_0001>
module attributes {stable_mosaic.version = 11 : i64} {
  func.func @_mm_gelu_bn_kernel(%arg0: i32, %arg1: memref<64x128xbf16, #tpu.memory_space<vmem>>, %arg2: memref<128x128xbf16, #tpu.memory_space<vmem>>, %arg3: memref<8x128xf32, #tpu.memory_space<vmem>>, %arg4: memref<64x128xbf16, #tpu.memory_space<vmem>>) attributes {dimension_semantics = [#tpu.dimension_semantics<parallel>], iteration_bounds = array<i64: 2>, scalar_prefetch = 0 : i64, scratch_operands = 0 : i64, tpu.core_type = #tpu.core_type<tc>, window_params = [{transform_indices = @transform_0, window_bounds = array<i64: 64, 128>}, {pipeline_mode = #tpu.pipeline_mode<synchronous>, transform_indices = @transform_1, window_bounds = array<i64: 128, 128>}, {pipeline_mode = #tpu.pipeline_mode<synchronous>, transform_indices = @transform_2, window_bounds = array<i64: 8, 128>}, {transform_indices = @transform_3, window_bounds = array<i64: 64, 128>}]} {
    %c0 = arith.constant 0 : index
    %c0_0 = arith.constant 0 : index
    %0 = vector.load %arg3[%c0, %c0_0] : memref<8x128xf32, #tpu.memory_space<vmem>>, vector<1x128xf32>
    %c1 = arith.constant 1 : index
    %c0_1 = arith.constant 0 : index
    %1 = vector.load %arg3[%c1, %c0_1] : memref<8x128xf32, #tpu.memory_space<vmem>>, vector<1x128xf32>
    %c2 = arith.constant 2 : index
    %c0_2 = arith.constant 0 : index
    %2 = vector.load %arg3[%c2, %c0_2] : memref<8x128xf32, #tpu.memory_space<vmem>>, vector<1x128xf32>
    %c0_3 = arith.constant 0 : index
    %c0_4 = arith.constant 0 : index
    %3 = vector.load %arg1[%c0_3, %c0_4] : memref<64x128xbf16, #tpu.memory_space<vmem>>, vector<64x128xbf16>
    %c0_5 = arith.constant 0 : index
    %c0_6 = arith.constant 0 : index
    %4 = vector.load %arg2[%c0_5, %c0_6] : memref<128x128xbf16, #tpu.memory_space<vmem>>, vector<128x128xbf16>
    %cst = arith.constant dense<0.000000e+00> : vector<64x128xf32>
    %5 = tpu.matmul %3, %4, %cst {dimension_numbers = #tpu.dot_dimension_numbers<[1], [0], [0], [1], [0, 0, 1, 1], [], []>} : vector<64x128xbf16>, vector<128x128xbf16>, vector<64x128xf32> -> vector<64x128xf32>
    %6 = vector.broadcast %0 : vector<1x128xf32> to vector<64x128xf32>
    %7 = arith.addf %5, %6 : vector<64x128xf32>
    %cst_7 = arith.constant 5.000000e-01 : f32
    %8 = vector.broadcast %cst_7 : f32 to vector<64x128xf32>
    %9 = arith.mulf %8, %7 : vector<64x128xf32>
    %cst_8 = arith.constant 0.707106769 : f32
    %10 = vector.broadcast %cst_8 : f32 to vector<64x128xf32>
    %11 = arith.mulf %7, %10 : vector<64x128xf32>
    %12 = math.erf %11 : vector<64x128xf32>
    %cst_9 = arith.constant 1.000000e+00 : f32
    %13 = vector.broadcast %cst_9 : f32 to vector<64x128xf32>
    %14 = arith.addf %13, %12 : vector<64x128xf32>
    %15 = arith.mulf %9, %14 : vector<64x128xf32>
    %16 = vector.broadcast %1 : vector<1x128xf32> to vector<64x128xf32>
    %17 = arith.mulf %15, %16 : vector<64x128xf32>
    %18 = vector.broadcast %2 : vector<1x128xf32> to vector<64x128xf32>
    %19 = arith.addf %17, %18 : vector<64x128xf32>
    %20 = arith.truncf %19 : vector<64x128xf32> to vector<64x128xbf16>
    %c0_10 = arith.constant 0 : index
    %c0_11 = arith.constant 0 : index
    %21 = vector.load %arg4[%c0_10, %c0_11] : memref<64x128xbf16, #tpu.memory_space<vmem>>, vector<64x128xbf16>
    tpu.vector_store %arg4[%c0_10, %c0_11], %20 {strides = array<i32>} : memref<64x128xbf16, #tpu.memory_space<vmem>>, vector<64x128xbf16>,
    return
  }
  func.func @transform_0(%arg0: i32) -> (i32, i32) {
    %c0_i32 = arith.constant 0 : i32
    %c0_i32_0 = arith.constant 0 : i32
    return %arg0, %c0_i32 : i32, i32
  }
  func.func @transform_1(%arg0: i32) -> (i32, i32) {
    %c0_i32 = arith.constant 0 : i32
    %c0_i32_0 = arith.constant 0 : i32
    %c0_i32_1 = arith.constant 0 : i32
    return %c0_i32, %c0_i32_0 : i32, i32
  }
  func.func @transform_2(%arg0: i32) -> (i32, i32) {
    %c0_i32 = arith.constant 0 : i32
    %c0_i32_0 = arith.constant 0 : i32
    %c0_i32_1 = arith.constant 0 : i32
    return %c0_i32, %c0_i32_0 : i32, i32
  }
  func.func @transform_3(%arg0: i32) -> (i32, i32) {
    %c0_i32 = arith.constant 0 : i32
    %c0_i32_0 = arith.constant 0 : i32
    return %arg0, %c0_i32 : i32, i32
  }
}

</mosaic_0001>

<llo_original>
// kernel: tpu_custom_call.1
$region0: #{tpu_custom_call.1}
  #allocation0 [shape = 'u32[]', space=smem, size = 0x4, offset = 0x4, fixed_abs, tag = 'smem constant byte address 0x4 - core index']
  #allocation1 [shape = 'u32[144,128]{1,0:T(1,128)}', space=vmem, size = 0x12000, scoped, tag = 'internal scratch']
  %s0 = inlined_call_operand.hbm [shape: bf16[128,128], index: 0, kind: input, shape index: {}]
  %s1 = inlined_call_operand.hbm [shape: bf16[128,128], index: 1, kind: input, shape index: {}]
  %s2 = inlined_call_operand.hbm [shape: f32[8,128], index: 2, kind: input, shape index: {}]
  %s3 = inlined_call_operand.hbm [shape: bf16[128,128], index: 3, kind: output, shape index: {}]
  %s4 = sld [smem:[#allocation0]]
  $region57: #{tpu_custom_call.1} parent=0
    _
  %s6 = ssub.s32 1, %s4
  %s7 = scalar_select 0, %s6, %s4
  $region1: #{tpu_custom_call.1} parent=0
    #allocation2 [shape = 'u8[32768]{0}', space=vmem, size = 0x8000, scoped, tag = 'input window, operand 0']
    #allocation3 [shape = 's32[2]{0}', space=sflag, size = 0x8, scoped, tag = 'scoped memory for tpu_custom_call.1']
    #allocation4 [shape = 's32[2]{0}', space=sflag, size = 0x8, scoped, tag = 'scoped memory for tpu_custom_call.1']
    #allocation5 [shape = 'u8[32768]{0}', space=vmem, size = 0x8000, scoped, tag = 'input window, operand 1, single buffered']
    #allocation6 [shape = 's32[1]{0}', space=sflag, size = 0x4, scoped, tag = 'scoped memory for tpu_custom_call.1']
    #allocation7 [shape = 'u8[4096]{0}', space=vmem, size = 0x1000, scoped, tag = 'input window, operand 2, single buffered']
    #allocation8 [shape = 'u8[32768]{0}', space=vmem, size = 0x8000, scoped, tag = 'output window, operand 0']
    %8 = vsyncpa [#allocation3], 0
    %s9 = scalar_lea.sflag [#allocation3], 1
    %10 = vsyncpa %s9, 0
    %11 = vsyncpa [#allocation6], 0
    %12 = vsyncpa [#allocation4], 0
    %s13 = scalar_lea.sflag [#allocation4], 1
    %14 = vsyncpa %s13, 0
    loop: start=0, step=1, limit=4
    $region2: #{tpu_custom_call.1} parent=1 // loop_pre_header
      _
    $region3: #{tpu_custom_call.1} parent=1 // loop_header
      %s16 = sphi 0, %s20
      %p17 = scmp.ge.s32.totalorder %s16, 4
      %s26 = sphi 0, %s28
      %s29 = sphi 0, %s26
      %s30 = sphi 0, %s29
      %s46 = sphi 0, %s30
      %s50 = sphi 0, %s50
      %s52 = sphi 0, %s50
      %s53 = sphi 0, %s52
      %s67 = sphi 0, %s53
      %s71 = sphi 0, %s71
      %s73 = sphi 0, %s71
      %s74 = sphi 0, %s73
      %s88 = sphi 0, %s74
      %s94 = sphi 0, %s96
      %s97 = sphi 0, %s94
      %s98 = sphi 0, %s97
      %s114 = sphi 0, %s98
    $region4: #{tpu_custom_call.1} parent=1 // loop_header_branch
      %19 = sbr.rel (%p17) target = $region8
    $region5: #{tpu_custom_call.1} parent=1 // loop_body
      %s21 = ssub.s32 %s16, 1
      %s22 = ssub.s32 %s16, 2
      %s23 = sadd.s32 %s16, 1
      %s24 = ssub.s32 %s16, %s23
      %p25 = scmp.eq.s32.totalorder %s24, 0
      %s27 = sadd.s32 %s26, 1
      %s28 = scalar_select %p25, %s26, %s27
      %p31 = pneg %p25
      %p32 = scmp.eq.s32.totalorder %s16, 1
      %p33 = por %p31, %p32
      %p34 = scmp.ne.s32.totalorder %s26, %s29
      %p35 = scmp.eq.s32.totalorder %s16, 0
      %p36 = por %p34, %p35
      %p37 = scmp.ne.s32.totalorder %s26, %s29
      %p38 = scmp.eq.s32.totalorder %s21, 1
      %p39 = por %p37, %p38
      %p40 = scmp.ne.s32.totalorder %s29, %s30
      %p41 = scmp.eq.s32.totalorder %s21, 0
      %p42 = por %p40, %p41
      %p43 = scmp.ne.s32.totalorder %s29, %s30
      %p44 = scmp.eq.s32.totalorder %s22, 1
      %p45 = por %p43, %p44
      %p47 = scmp.ne.s32.totalorder %s30, %s46
      %p48 = scmp.eq.s32.totalorder %s22, 0
      %p49 = por %p47, %p48
      %s51 = sadd.s32 %s50, 1
      %p54 = scmp.eq.s32.totalorder %s16, 1
      %p55 = scmp.ne.s32.totalorder %s50, %s52
      %p56 = scmp.eq.s32.totalorder %s16, 0
      %p57 = por %p55, %p56
      %p58 = scmp.ne.s32.totalorder %s50, %s52
      %p59 = scmp.eq.s32.totalorder %s21, 1
      %p60 = por %p58, %p59
      %p61 = scmp.ne.s32.totalorder %s52, %s53
      %p62 = scmp.eq.s32.totalorder %s21, 0
      %p63 = por %p61, %p62
      %p64 = scmp.ne.s32.totalorder %s52, %s53
      %p65 = scmp.eq.s32.totalorder %s22, 1
      %p66 = por %p64, %p65
      %p68 = scmp.ne.s32.totalorder %s53, %s67
      %p69 = scmp.eq.s32.totalorder %s22, 0
      %p70 = por %p68, %p69
      %s72 = sadd.s32 %s71, 1
      %p75 = scmp.eq.s32.totalorder %s16, 1
      %p76 = scmp.ne.s32.totalorder %s71, %s73
      %p77 = scmp.eq.s32.totalorder %s16, 0
      %p78 = por %p76, %p77
      %p79 = scmp.ne.s32.totalorder %s71, %s73
      %p80 = scmp.eq.s32.totalorder %s21, 1
      %p81 = por %p79, %p80
      %p82 = scmp.ne.s32.totalorder %s73, %s74
      %p83 = scmp.eq.s32.totalorder %s21, 0
      %p84 = por %p82, %p83
      %p85 = scmp.ne.s32.totalorder %s73, %s74
      %p86 = scmp.eq.s32.totalorder %s22, 1
      %p87 = por %p85, %p86
      %p89 = scmp.ne.s32.totalorder %s74, %s88
      %p90 = scmp.eq.s32.totalorder %s22, 0
      %p91 = por %p89, %p90
      %s92 = ssub.s32 %s16, %s23
      %p93 = scmp.eq.s32.totalorder %s92, 0
      %s95 = sadd.s32 %s94, 1
      %s96 = scalar_select %p93, %s94, %s95
      %p99 = pneg %p93
      %p100 = scmp.eq.s32.totalorder %s16, 1
      %p101 = por %p99, %p100
      %p102 = scmp.ne.s32.totalorder %s94, %s97
      %p103 = scmp.eq.s32.totalorder %s16, 0
      %p104 = por %p102, %p103
      %p105 = scmp.ne.s32.totalorder %s94, %s97
      %p106 = scmp.eq.s32.totalorder %s21, 1
      %p107 = por %p105, %p106
      %p108 = scmp.ne.s32.totalorder %s97, %s98
      %p109 = scmp.eq.s32.totalorder %s21, 0
      %p110 = por %p108, %p109
      %p111 = scmp.ne.s32.totalorder %s97, %s98
      %p112 = scmp.eq.s32.totalorder %s22, 1
      %p113 = por %p111, %p112
      %p115 = scmp.ne.s32.totalorder %s98, %s114
      %p116 = scmp.eq.s32.totalorder %s22, 0
      %p117 = por %p115, %p116
      %p118 = scmp.le.s32.totalorder 1, %s16
      %p119 = scmp.lt.s32.totalorder %s16, 3
      %p120 = pnand %p118, %p119
      %p121 = pneg %p120
      // Predicated region
      $region9: #{tpu_custom_call.1} parent=5 // pred_check
        _
      $region10: #{tpu_custom_call.1} parent=5 // pred_check_branch
        %123 = sbr.rel (%p120) target = $region12
      $region11: #{tpu_custom_call.1} parent=5 // pred_region
        %s124 = ssub.s32 %s16, 1
        // Predicated region
        $region13: #{tpu_custom_call.1} parent=11 // pred_check
          %p125 = pneg %p63
        $region14: #{tpu_custom_call.1} parent=11 // pred_check_branch
          %127 = sbr.rel (%p125) target = $region16
        $region15: #{tpu_custom_call.1} parent=11 // pred_region
          %s129 = ssub.s32 1024, 1024
          %130 = vsyncadd [#allocation6], %s129
          %s131 = sshll.u32 [#allocation5], 4
          %s132 = int_to_ptr.vmem [resolvable:$true] %s131
          %137 = dma.hbm_to_vmem [thread:$0]  %s1, 1024, %s132, [#allocation6], 64, 64, 4
        $region16: #{tpu_custom_call.1} parent=11 // pred_fallthru
          _
        // Predicated region
        $region17: #{tpu_custom_call.1} parent=11 // pred_check
          %p138 = pneg %p84
        $region18: #{tpu_custom_call.1} parent=11 // pred_check_branch
          %140 = sbr.rel (%p138) target = $region20
        $region19: #{tpu_custom_call.1} parent=11 // pred_region
          %s142 = ssub.s32 128, 128
          %143 = vsyncadd [#allocation6], %s142
          %s145 = sshll.u32 [#allocation7], 4
          %s146 = int_to_ptr.vmem [resolvable:$true] %s145
          %148 = dma.hbm_to_vmem [thread:$0]  %s2, 128, %s146, [#allocation6]
        $region20: #{tpu_custom_call.1} parent=11 // pred_fallthru
          _
      $region12: #{tpu_custom_call.1} parent=5 // pred_fallthru
        _
      %p149 = scmp.lt.s32.totalorder %s16, 2
      // Predicated region
      $region21: #{tpu_custom_call.1} parent=5 // pred_check
        %p150 = pneg %p149
      $region22: #{tpu_custom_call.1} parent=5 // pred_check_branch
        %152 = sbr.rel (%p150) target = $region24
      $region23: #{tpu_custom_call.1} parent=5 // pred_region
        // Predicated region
        $region25: #{tpu_custom_call.1} parent=23 // pred_check
          %p153 = pneg %p36
        $region26: #{tpu_custom_call.1} parent=23 // pred_check_branch
          %155 = sbr.rel (%p153) target = $region28
        $region27: #{tpu_custom_call.1} parent=23 // pred_region
          %s156 = sand.u32 %s26, 1
          %s157 = scalar_lea.sflag [#allocation3], %s156
          %s158 = sand.u32 %s26, 1
          %s159 = smul.addr %s158, 32
          %s160 = scalar_lea.vmem [#allocation2], %s159
          %s161 = smul.u32 8, %s16
          %s163 = ssub.s32 512, 512
          %164 = vsyncadd %s157, %s163
          %s165 = smul.addr %s161, 64
          %s166 = scalar_lea.hbm %s0, %s165
          %s167 = sshll.u32 %s160, 4
          %s168 = int_to_ptr.vmem [resolvable:$true] %s167
          %173 = dma.hbm_to_vmem [thread:$0]  %s166, 512, %s168, %s157, 64, 64, 4
        $region28: #{tpu_custom_call.1} parent=23 // pred_fallthru
          _
      $region24: #{tpu_custom_call.1} parent=5 // pred_fallthru
        _
      %p174 = scmp.le.s32.totalorder 1, %s16
      %p175 = scmp.lt.s32.totalorder %s16, 3
      %p176 = pnand %p174, %p175
      %p177 = pneg %p176
      // Predicated region
      $region29: #{tpu_custom_call.1} parent=5 // pred_check
        _
      $region30: #{tpu_custom_call.1} parent=5 // pred_check_branch
        %179 = sbr.rel (%p176) target = $region32
      $region31: #{tpu_custom_call.1} parent=5 // pred_region
        %s180 = ssub.s32 %s16, 1
        %s181 = sand.u32 %s29, 1
        %s182 = scalar_lea.sflag [#allocation3], %s181
        %s183 = sand.u32 %s29, 1
        %s184 = smul.addr %s183, 32
        %s185 = scalar_lea.vmem [#allocation2], %s184
        // Predicated region
        $region33: #{tpu_custom_call.1} parent=31 // pred_check
          %p186 = pneg %p42
        $region34: #{tpu_custom_call.1} parent=31 // pred_check_branch
          %188 = sbr.rel (%p186) target = $region36
        $region35: #{tpu_custom_call.1} parent=31 // pred_region
          %189 = dma.done %s182, 512
        $region36: #{tpu_custom_call.1} parent=31 // pred_fallthru
          _
        // Predicated region
        $region37: #{tpu_custom_call.1} parent=31 // pred_check
          %p190 = pneg %p63
        $region38: #{tpu_custom_call.1} parent=31 // pred_check_branch
          %192 = sbr.rel (%p190) target = $region40
        $region39: #{tpu_custom_call.1} parent=31 // pred_region
          %193 = dma.done [#allocation6], 1024
        $region40: #{tpu_custom_call.1} parent=31 // pred_fallthru
          _
        // Predicated region
        $region41: #{tpu_custom_call.1} parent=31 // pred_check
          %p194 = pneg %p84
        $region42: #{tpu_custom_call.1} parent=31 // pred_check_branch
          %196 = sbr.rel (%p194) target = $region44
        $region43: #{tpu_custom_call.1} parent=31 // pred_region
          %197 = dma.done [#allocation6], 128
        $region44: #{tpu_custom_call.1} parent=31 // pred_fallthru
          _
        %s198 = sand.u32 %s29, 1
        %s199 = scalar_lea.sflag [#allocation3], %s198
        %s200 = sand.u32 %s29, 1
        %s201 = smul.addr %s200, 32
        %s202 = scalar_lea.vmem [#allocation2], %s201
        %p203 = pneg %p42
        %p204 = pneg %p39
        %p205 = pneg %p63
        %p206 = pneg %p60
        %p207 = pneg %p84
        %p208 = pneg %p81
        %p209 = pneg %p110
        %p210 = pneg %p107
        %s211 = sand.u32 %s97, 1
        %s212 = scalar_lea.sflag [#allocation4], %s211
        %s213 = sand.u32 %s97, 1
        %s214 = smul.addr %s213, 32
        %s215 = scalar_lea.vmem [#allocation8], %s214
        %s216 = smul.u32 8, %s21
        %s217 = smul.u32 8, %s21
        %v219 = vld [vmem:[#allocation7] sm:$0x1]
        %v220 = vld [vmem:[#allocation7 + $0x1] sm:$0x1]
        %v221 = vld [vmem:[#allocation7 + $0x2] sm:$0x1]
        %v222 = vld [vmem:[%s185] sm:$0xf]
        %v223 = vld [vmem:[%s185 + $0x4] sm:$0xf]
        %v224 = vld [vmem:[%s185 + $0x8] sm:$0xf]
        %v225 = vld [vmem:[%s185 + $0xc] sm:$0xf]
        %v226 = vld [vmem:[%s185 + $0x10] sm:$0xf]
        %v227 = vld [vmem:[%s185 + $0x14] sm:$0xf]
        %v228 = vld [vmem:[%s185 + $0x18] sm:$0xf]
        %v229 = vld [vmem:[%s185 + $0x1c] sm:$0xf]
        %v230 = vld [vmem:[#allocation5] sm:$0xf]
        %v231 = vld [vmem:[#allocation5 + $0x4] sm:$0xf]
        %v232 = vld [vmem:[#allocation5 + $0x8] sm:$0xf]
        %v233 = vld [vmem:[#allocation5 + $0xc] sm:$0xf]
        %v234 = vld [vmem:[#allocation5 + $0x10] sm:$0xf]
        %v235 = vld [vmem:[#allocation5 + $0x14] sm:$0xf]
        %v236 = vld [vmem:[#allocation5 + $0x18] sm:$0xf]
        %v237 = vld [vmem:[#allocation5 + $0x1c] sm:$0xf]
        %v238 = vld [vmem:[#allocation5 + $0x20] sm:$0xf]
        %v239 = vld [vmem:[#allocation5 + $0x24] sm:$0xf]
        %v240 = vld [vmem:[#allocation5 + $0x28] sm:$0xf]
        %v241 = vld [vmem:[#allocation5 + $0x2c] sm:$0xf]
        %v242 = vld [vmem:[#allocation5 + $0x30] sm:$0xf]
        %v243 = vld [vmem:[#allocation5 + $0x34] sm:$0xf]
        %v244 = vld [vmem:[#allocation5 + $0x38] sm:$0xf]
        %v245 = vld [vmem:[#allocation5 + $0x3c] sm:$0xf]
        %v246 = vlaneseq
        %v247 = vshrl.u32 %v246, 7
        %v248 = vsub.s32 0, %v247
        %v249 = vrot.slane %v219, %v248
        %v258 = vunpack.c.l.b16 %v222
        %v259 = vunpack.c.l.b16 %v223
        %v260 = vunpack.c.l.b16 %v224
        %v261 = vunpack.c.l.b16 %v225
        %v262 = vunpack.c.l.b16 %v226
        %v263 = vunpack.c.l.b16 %v227
        %v264 = vunpack.c.l.b16 %v228
        %v265 = vunpack.c.l.b16 %v229
        %v266 = vpack.c.b16 %v259, %v258
        %v267 = vpack.c.b16 %v261, %v260
        %v268 = vpack.c.b16 %v263, %v262
        %v269 = vpack.c.b16 %v265, %v264
        %v290 = vunpack.c.l.b16 %v230
        %v291 = vunpack.c.l.b16 %v231
        %v292 = vunpack.c.l.b16 %v232
        %v293 = vunpack.c.l.b16 %v233
        %v294 = vunpack.c.l.b16 %v234
        %v295 = vunpack.c.l.b16 %v235
        %v296 = vunpack.c.l.b16 %v236
        %v297 = vunpack.c.l.b16 %v237
        %v298 = vunpack.c.l.b16 %v238
        %v299 = vunpack.c.l.b16 %v239
        %v300 = vunpack.c.l.b16 %v240
        %v301 = vunpack.c.l.b16 %v241
        %v302 = vunpack.c.l.b16 %v242
        %v303 = vunpack.c.l.b16 %v243
        %v304 = vunpack.c.l.b16 %v244
        %v305 = vunpack.c.l.b16 %v245
        %v306 = vpack.c.b16 %v291, %v290
        %v307 = vpack.c.b16 %v293, %v292
        %v308 = vpack.c.b16 %v295, %v294
        %v309 = vpack.c.b16 %v297, %v296
        %v310 = vpack.c.b16 %v299, %v298
        %v311 = vpack.c.b16 %v301, %v300
        %v312 = vpack.c.b16 %v303, %v302
        %v313 = vpack.c.b16 %v305, %v304
        %322 = vmatprep.subr.bf16.mxu0 0
        %323 = vmatpush1.bf16.msra.mxu0 %v306
        %324 = vmatprep.subr.bf16.mxu0 0
        %325 = vmatpush1.bf16.msra.mxu0 %v307
        %326 = vmatprep.subr.bf16.mxu0 0
        %327 = vmatpush1.bf16.msra.mxu0 %v308
        %328 = vmatprep.subr.bf16.mxu0 0
        %329 = vmatpush1.bf16.msra.mxu0 %v309
        %330 = vmatprep.subr.bf16.mxu0 0
        %331 = vmatpush1.bf16.msra.mxu0 %v310
        %332 = vmatprep.subr.bf16.mxu0 0
        %333 = vmatpush1.bf16.msra.mxu0 %v311
        %334 = vmatprep.subr.bf16.mxu0 0
        %335 = vmatpush1.bf16.msra.mxu0 %v312
        %336 = vmatprep.subr.bf16.mxu0 0
        %337 = vmatpush1.bf16.msra.mxu0 %v313
        %338 = vmatprep.subr.bf16.mxu0 0
        %339 = vmatpush1.bf16.msra.mxu0 0
        %340 = vmatprep.subr.bf16.mxu0 0
        %341 = vmatpush1.bf16.msra.mxu0 0
        %342 = vmatprep.subr.bf16.mxu0 0
        %343 = vmatpush1.bf16.msra.mxu0 0
        %344 = vmatprep.subr.bf16.mxu0 0
        %345 = vmatpush1.bf16.msra.mxu0 0
        %346 = vmatprep.subr.bf16.mxu0 0
        %347 = vmatpush1.bf16.msra.mxu0 0
        %348 = vmatprep.subr.bf16.mxu0 0
        %349 = vmatpush1.bf16.msra.mxu0 0
        %350 = vmatprep.subr.bf16.mxu0 0
        %351 = vmatpush1.bf16.msra.mxu0 0
        %352 = vmatprep.subr.bf16.mxu0 0
        %353 = vmatpush1.bf16.msra.mxu0 0
        %354 = vmatprep.mubr.bf16.mxu0 0
        %355 = vmatmul.mubr.bf16.gmra.mrb[0].mxu0 %v266
        %v356 = vpop.f32.mrb[0].mxu0
        %v357 = vadd.f32 %v249, %v356
        %v358 = vpop.f32.mrb[0].mxu0
        %v359 = vpop.f32.mrb[0].mxu0
        %v360 = vadd.f32 %v249, %v359
        %v361 = vpop.f32.mrb[0].mxu0
        %362 = vmatprep.mubr.bf16.mxu0 0
        %363 = vmatmul.mubr.bf16.gmra.mrb[0].mxu0 %v267
        %v364 = vpop.f32.mrb[0].mxu0
        %v365 = vadd.f32 %v249, %v364
        %v366 = vpop.f32.mrb[0].mxu0
        %v367 = vpop.f32.mrb[0].mxu0
        %v368 = vadd.f32 %v249, %v367
        %v369 = vpop.f32.mrb[0].mxu0
        %370 = vmatprep.mubr.bf16.mxu0 0
        %371 = vmatmul.mubr.bf16.gmra.mrb[0].mxu0 %v268
        %v372 = vpop.f32.mrb[0].mxu0
        %v373 = vadd.f32 %v249, %v372
        %v374 = vpop.f32.mrb[0].mxu0
        %v375 = vpop.f32.mrb[0].mxu0
        %v376 = vadd.f32 %v249, %v375
        %v377 = vpop.f32.mrb[0].mxu0
        %378 = vmatprep.mubr.bf16.mxu0 0
        %379 = vmatmul.mubr.bf16.gmra.mrb[0].mxu0 %v269
        %v380 = vpop.f32.mrb[0].mxu0
        %v381 = vadd.f32 %v249, %v380
        %v382 = vpop.f32.mrb[0].mxu0
        %v383 = vpop.f32.mrb[0].mxu0
        %v384 = vadd.f32 %v249, %v383
        %v385 = vpop.f32.mrb[0].mxu0
        %386 = vdwg.mxu0
        %v387 = vmul.f32 %v357, 0.5
        %v388 = vmul.f32 %v360, 0.5
        %v389 = vmul.f32 %v365, 0.5
        %v390 = vmul.f32 %v368, 0.5
        %v391 = vmul.f32 %v373, 0.5
        %v392 = vmul.f32 %v376, 0.5
        %v393 = vmul.f32 %v381, 0.5
        %v394 = vmul.f32 %v384, 0.5
        %v395 = vmul.f32 %v357, 0.70710677
        %v396 = vmul.f32 %v360, 0.70710677
        %v397 = vmul.f32 %v365, 0.70710677
        %v398 = vmul.f32 %v368, 0.70710677
        %v399 = vmul.f32 %v373, 0.70710677
        %v400 = vmul.f32 %v376, 0.70710677
        %v401 = vmul.f32 %v381, 0.70710677
        %v402 = vmul.f32 %v384, 0.70710677
        %v403 = verf.f32.pop %v395
        %v404 = verf.f32.pop %v396
        %v405 = verf.f32.pop %v397
        %v406 = verf.f32.pop %v398
        %v407 = verf.f32.pop %v399
        %v408 = verf.f32.pop %v400
        %v409 = verf.f32.pop %v401
        %v410 = verf.f32.pop %v402
        %v411 = vadd.f32 %v403, 1.0
        %v412 = vadd.f32 %v404, 1.0
        %v413 = vadd.f32 %v405, 1.0
        %v414 = vadd.f32 %v406, 1.0
        %v415 = vadd.f32 %v407, 1.0
        %v416 = vadd.f32 %v408, 1.0
        %v417 = vadd.f32 %v409, 1.0
        %v418 = vadd.f32 %v410, 1.0
        %v419 = vmul.f32 %v387, %v411
        %v420 = vmul.f32 %v388, %v412
        %v421 = vmul.f32 %v389, %v413
        %v422 = vmul.f32 %v390, %v414
        %v423 = vmul.f32 %v391, %v415
        %v424 = vmul.f32 %v392, %v416
        %v425 = vmul.f32 %v393, %v417
        %v426 = vmul.f32 %v394, %v418
        %v427 = vlaneseq
        %v428 = vshrl.u32 %v427, 7
        %v429 = vsub.s32 0, %v428
        %v430 = vrot.slane %v220, %v429
        %v431 = vmul.f32 %v419, %v430
        %v432 = vmul.f32 %v420, %v430
        %v433 = vmul.f32 %v421, %v430
        %v434 = vmul.f32 %v422, %v430
        %v435 = vmul.f32 %v423, %v430
        %v436 = vmul.f32 %v424, %v430
        %v437 = vmul.f32 %v425, %v430
        %v438 = vmul.f32 %v426, %v430
        %v439 = vlaneseq
        %v440 = vshrl.u32 %v439, 7
        %v441 = vsub.s32 0, %v440
        %v442 = vrot.slane %v221, %v441
        %v443 = vadd.f32 %v431, %v442
        %v444 = vadd.f32 %v432, %v442
        %v445 = vadd.f32 %v433, %v442
        %v446 = vadd.f32 %v434, %v442
        %v447 = vadd.f32 %v435, %v442
        %v448 = vadd.f32 %v436, %v442
        %v449 = vadd.f32 %v437, %v442
        %v450 = vadd.f32 %v438, %v442
        %v451 = vpack.c.bf16 %v444, %v443
        %v452 = vpack.c.bf16 %v446, %v445
        %v453 = vpack.c.bf16 %v448, %v447
        %v454 = vpack.c.bf16 %v450, %v449
        %v459 = vunpack.c.l.b16 %v451
        %v460 = vunpack.c.h.b16 %v451
        %v461 = vunpack.c.l.b16 %v452
        %v462 = vunpack.c.h.b16 %v452
        %v463 = vunpack.c.l.b16 %v453
        %v464 = vunpack.c.h.b16 %v453
        %v465 = vunpack.c.l.b16 %v454
        %v466 = vunpack.c.h.b16 %v454
        %v467 = vpack.c.b16 %v459, %v459
        %v468 = vpack.c.b16 %v460, %v460
        %v469 = vpack.c.b16 %v461, %v461
        %v470 = vpack.c.b16 %v462, %v462
        %v471 = vpack.c.b16 %v463, %v463
        %v472 = vpack.c.b16 %v464, %v464
        %v473 = vpack.c.b16 %v465, %v465
        %v474 = vpack.c.b16 %v466, %v466
        %483 = vst [vmem:[%s215] sm:$0xf] %v467
        %484 = vst [vmem:[%s215 + $0x4] sm:$0xf] %v468
        %485 = vst [vmem:[%s215 + $0x8] sm:$0xf] %v469
        %486 = vst [vmem:[%s215 + $0xc] sm:$0xf] %v470
        %487 = vst [vmem:[%s215 + $0x10] sm:$0xf] %v471
        %488 = vst [vmem:[%s215 + $0x14] sm:$0xf] %v472
        %489 = vst [vmem:[%s215 + $0x18] sm:$0xf] %v473
        %490 = vst [vmem:[%s215 + $0x1c] sm:$0xf] %v474
        %s491 = sand.u32 %s97, 1
        %s492 = scalar_lea.sflag [#allocation4], %s491
        %s493 = sand.u32 %s97, 1
        %s494 = smul.addr %s493, 32
        %s495 = scalar_lea.vmem [#allocation8], %s494
        // Predicated region
        $region45: #{tpu_custom_call.1} parent=31 // pred_check
          %p496 = pneg %p107
        $region46: #{tpu_custom_call.1} parent=31 // pred_check_branch
          %498 = sbr.rel (%p496) target = $region48
        $region47: #{tpu_custom_call.1} parent=31 // pred_region
          %s499 = smul.u32 8, %s21
          %s501 = ssub.s32 512, 512
          %502 = vsyncadd %s492, %s501
          %s503 = smul.addr %s499, 64
          %s504 = scalar_lea.hbm %s3, %s503
          %s505 = sshll.u32 %s495, 4
          %s506 = int_to_ptr.vmem [resolvable:$true] %s505
          %511 = dma.vmem_to_hbm [thread:$0]  %s506, 512, %s504, %s492, 64, 64, 4
        $region48: #{tpu_custom_call.1} parent=31 // pred_fallthru
          _
      $region32: #{tpu_custom_call.1} parent=5 // pred_fallthru
        _
      %p512 = scmp.le.s32.totalorder 2, %s16
      // Predicated region
      $region49: #{tpu_custom_call.1} parent=5 // pred_check
        %p513 = pneg %p512
      $region50: #{tpu_custom_call.1} parent=5 // pred_check_branch
        %515 = sbr.rel (%p513) target = $region52
      $region51: #{tpu_custom_call.1} parent=5 // pred_region
        %s516 = ssub.s32 %s16, 2
        // Predicated region
        $region53: #{tpu_custom_call.1} parent=51 // pred_check
          %p517 = pneg %p113
        $region54: #{tpu_custom_call.1} parent=51 // pred_check_branch
          %519 = sbr.rel (%p517) target = $region56
        $region55: #{tpu_custom_call.1} parent=51 // pred_region
          %s520 = sand.u32 %s98, 1
          %s521 = scalar_lea.sflag [#allocation4], %s520
          %s522 = sand.u32 %s98, 1
          %s523 = smul.addr %s522, 32
          %s524 = scalar_lea.vmem [#allocation8], %s523
          %525 = dma.done %s521, 512
        $region56: #{tpu_custom_call.1} parent=51 // pred_fallthru
          _
      $region52: #{tpu_custom_call.1} parent=5 // pred_fallthru
        _
    $region6: #{tpu_custom_call.1} parent=1 // loop_footer
      %s20 = sadd.s32 1, %s16
    $region7: #{tpu_custom_call.1} parent=1 // loop_footer_branch
      %15 = sbr.rel target = $region3
    $region8: #{tpu_custom_call.1} parent=1 // loop_exit
      _
    %526 = vsyncpa [#allocation3], 1
    %s527 = scalar_lea.sflag [#allocation3], 1
    %528 = vsyncpa %s527, 1
    %529 = vsyncpa [#allocation6], 1
    %530 = vsyncpa [#allocation4], 1
    %s531 = scalar_lea.sflag [#allocation4], 1
    %532 = vsyncpa %s531, 1

</llo_original>
